<compile_context>
chip_gen: v7x
topology: tpu7x:2x2x1
jax: 0.10.0
libtpu: 0.0.40
codegen_flags: <defaults>
</compile_context>

<pallas_src>
import jax
import jax.numpy as jnp
from jax.experimental import pallas as pl
from jax.experimental.pallas import tpu as pltpu

LEAKY_SLOPE = 0.2
K = 3            # conv kernel size
_HALO_BLOCK = 128  # lane-aligned halo block width (only 2 of its columns are used)


# --------------------------------------------------------------------------
# tiling / VMEM planning helpers
# --------------------------------------------------------------------------
def _vmem_capacity_bytes():
    try:
        info = pltpu.get_tpu_info()
        for name in ("vmem_capacity_bytes", "vmem_bytes"):
            cap = getattr(info, name, None)
            if cap:
                return int(cap)
    except Exception:
        pass
    return 64 * 2 ** 20  # conservative default (v7x has 64 MiB / TC)


def _auto_tl_target(C, vmem_cap, use_bf16):
    wsize = 2 if use_bf16 else 4
    wbytes = 2 * (K * C * C * wsize + C * 4)          # both convs' weights+biases
    per_col = 12 * C * 4                              # ~12 live f32 (C,TL) slabs/step
    budget = int(vmem_cap * 0.55) - 2 * wbytes        # weights may be double-buffered
    tl = max(budget, 0) // per_col
    hi = 4096 if vmem_cap >= 96 * 2 ** 20 else 1024   # bigger tiles on 128 MiB parts
    return int(max(128, min((tl // 128) * 128, hi)))


def _plan_tiles(L, tl_target):
    """Return (TL, T, Lp).  Single full-length tile for short sequences (block
    equals the full dim, so any L is legal); otherwise a 128-multiple tile that
    divides Lp = round_up(L, 128).  Never falls back to a giant TL=L tile."""
    if L < 256 or tl_target >= L:
        return L, 1, L
    Lp = ((L + 127) // 128) * 128
    t = max(128, (min(tl_target, Lp) // 128) * 128)
    while t > 128 and Lp % t != 0:
        t -= 128
    return t, Lp // t, Lp


def _vmem_limit_bytes(C, TL, use_bf16, vmem_cap, multi_tile):
    wsize = 2 if use_bf16 else 4
    wbytes = 2 * (K * C * C * wsize + C * 4)
    est = (4 * C * TL * 4                                   # 2x x blocks + 2x out blocks
           + (4 * C * _HALO_BLOCK * 4 if multi_tile else 0)  # halo blocks
           + 2 * wbytes                                      # weights (double-buffered)
           + 8 * C * TL * 4)                                 # in-kernel temporaries
    cap = min(int(vmem_cap * 0.8), 100 * 2 ** 20)
    return int(min(max(est, 32 * 2 ** 20), cap))


# --------------------------------------------------------------------------
# kernel
# --------------------------------------------------------------------------
def _make_kernel(C, TL, T, L_valid, halo, ragged, compute_dtype):
    HW = _HALO_BLOCK
    slope = LEAKY_SLOPE

    def compute(xc_ref, xl_ref, xr_ref, w1_ref, b1_ref, w2_ref, b2_ref, out_ref):
        j = pl.program_id(1)
        xc = xc_ref[...]                          # (C, TL) f32 (residual / conv input)
        xq = xc.astype(compute_dtype)

        # 2-column x halos; zero at the global edges (= the conv zero padding).
        if halo:
            xl2 = jnp.where(j > 0, xl_ref[:, HW - 2:HW], 0.0).astype(compute_dtype)
            xr2 = jnp.where(j < T - 1, xr_ref[:, 0:2], 0.0).astype(compute_dtype)
        else:
            xl2 = jnp.zeros((C, 2), compute_dtype)
            xr2 = jnp.zeros((C, 2), compute_dtype)

        w1_0, w1_1, w1_2 = w1_ref[0], w1_ref[1], w1_ref[2]
        b1 = b1_ref[...]

        # ---- conv1 (+bias, LeakyReLU): 3 accumulated MXU matmuls, no staging ----
        x_m1 = jnp.concatenate([xl2[:, 1:2], xq[:, :TL - 1]], axis=1)   # x[t-1]
        x_p1 = jnp.concatenate([xq[:, 1:], xr2[:, 0:1]], axis=1)        # x[t+1]
        h = jnp.dot(w1_0, x_m1, preferred_element_type=jnp.float32)
        h = h + jnp.dot(w1_1, xq, preferred_element_type=jnp.float32)
        h = h + jnp.dot(w1_2, x_p1, preferred_element_type=jnp.float32)
        h = h + b1
        h = jnp.where(h > 0, h, slope * h)                               # (C, TL) f32

        if ragged:
            # ragged-length fallback only: zero h at global columns >= L
            col = jax.lax.broadcasted_iota(jnp.int32, (C, TL), 1) + j * TL
            h = jnp.where(col < L_valid, h, 0.0)

        # ---- boundary columns h[-1], h[TL] needed by conv2 (tiny dots) ----
        if halo:
            e0 = jnp.concatenate([xl2[:, 0:1], xq[:, TL - 1:TL]], axis=1)
            e1 = jnp.concatenate([xl2[:, 1:2], xr2[:, 0:1]], axis=1)
            e2 = jnp.concatenate([xq[:, 0:1], xr2[:, 1:2]], axis=1)
            hb = (jnp.dot(w1_0, e0, preferred_element_type=jnp.float32)
                  + jnp.dot(w1_1, e1, preferred_element_type=jnp.float32)
                  + jnp.dot(w1_2, e2, preferred_element_type=jnp.float32) + b1)
            hb = jnp.where(hb > 0, hb, slope * hb)
            hl = jnp.where(j > 0, hb[:, 0:1], 0.0).astype(compute_dtype)
            hr = jnp.where(j < T - 1, hb[:, 1:2], 0.0).astype(compute_dtype)
        else:
            hl = jnp.zeros((C, 1), compute_dtype)
            hr = jnp.zeros((C, 1), compute_dtype)

        # ---- conv2 (+bias) + residual: 3 accumulated MXU matmuls ----
        hq = h.astype(compute_dtype)
        h_m1 = jnp.concatenate([hl, hq[:, :TL - 1]], axis=1)
        h_p1 = jnp.concatenate([hq[:, 1:], hr], axis=1)
        y = jnp.dot(w2_ref[0], h_m1, preferred_element_type=jnp.float32)
        y = y + jnp.dot(w2_ref[1], hq, preferred_element_type=jnp.float32)
        y = y + jnp.dot(w2_ref[2], h_p1, preferred_element_type=jnp.float32)
        y = y + b2_ref[...] + xc
        out_ref[...] = y.astype(out_ref.dtype)

    if halo:
        return compute

    def compute_single(xc_ref, w1_ref, b1_ref, w2_ref, b2_ref, out_ref):
        compute(xc_ref, None, None, w1_ref, b1_ref, w2_ref, b2_ref, out_ref)

    return compute_single


# --------------------------------------------------------------------------
# wrapper
# --------------------------------------------------------------------------
def resblock(x, w1, b1, w2, b2, *, tl_target=None, use_bf16=False):
    """x: (N, C, L) f32.  w*: (C, C, 3), b*: (C,)."""
    N, C, L = x.shape
    vmem_cap = _vmem_capacity_bytes()
    if tl_target is None:
        tl_target = _auto_tl_target(C, vmem_cap, use_bf16)
    TL, T, Lp = _plan_tiles(L, tl_target)
    multi_tile = T > 1
    ragged = Lp != L

    # weight layout: (K, C_out, C_in) so w_ref[k] is an aligned (C, C) MXU operand
    wdtype = jnp.bfloat16 if use_bf16 else jnp.float32
    w1s = jnp.transpose(w1, (2, 0, 1)).astype(wdtype)
    w2s = jnp.transpose(w2, (2, 0, 1)).astype(wdtype)
    b1c = b1.reshape(C, 1).astype(jnp.float32)
    b2c = b2.reshape(C, 1).astype(jnp.float32)

    compute_dtype = jnp.bfloat16 if use_bf16 else jnp.float32
    kernel = _make_kernel(C, TL, T, L, multi_tile, ragged, compute_dtype)
    vmem_limit = _vmem_limit_bytes(C, TL, use_bf16, vmem_cap, multi_tile)

    w_specs = [
        pl.BlockSpec((K, C, C), lambda n, j: (0, 0, 0)),   # w1 (resident)
        pl.BlockSpec((C, 1), lambda n, j: (0, 0)),          # b1
        pl.BlockSpec((K, C, C), lambda n, j: (0, 0, 0)),   # w2
        pl.BlockSpec((C, 1), lambda n, j: (0, 0)),          # b2
    ]

    if multi_tile:
        xin = jnp.pad(x, ((0, 0), (0, 0), (0, Lp - L))) if ragged else x
        BPT = TL // _HALO_BLOCK
        NB = Lp // _HALO_BLOCK
        in_specs = [
            pl.BlockSpec((None, C, TL), lambda n, j: (n, 0, j)),               # x tile j
            pl.BlockSpec((None, C, _HALO_BLOCK),                               # tail of tile j-1
                         lambda n, j: (n, 0, jnp.maximum(j * BPT - 1, 0))),
            pl.BlockSpec((None, C, _HALO_BLOCK),                               # head of tile j+1
                         lambda n, j: (n, 0, jnp.minimum((j + 1) * BPT, NB - 1))),
        ] + w_specs
        args = (xin, xin, xin, w1s, b1c, w2s, b2c)
    else:
        in_specs = [pl.BlockSpec((None, C, L), lambda n, j: (n, 0, 0))] + w_specs
        args = (x, w1s, b1c, w2s, b2c)

    out = pl.pallas_call(
        kernel,
        out_shape=jax.ShapeDtypeStruct((N, C, Lp), x.dtype),
        grid_spec=pltpu.PrefetchScalarGridSpec(
            num_scalar_prefetch=0,
            grid=(N, T),
            in_specs=in_specs,
            out_specs=pl.BlockSpec((None, C, TL), lambda n, j: (n, 0, j)),
        ),
        compiler_params=pltpu.CompilerParams(
            dimension_semantics=("parallel", "parallel"),   # no carries -> megacore on both axes
            vmem_limit_bytes=vmem_limit),
    )(*args)

    if ragged:
        out = out[:, :, :L]
    return out


# --------------------------------------------------------------------------
# plain-JAX reference (mirrors the PyTorch forward) and test harness
# --------------------------------------------------------------------------
def resblock_ref(x, w1, b1, w2, b2):
    def conv1d(x, w, b):
        out = jax.lax.conv_general_dilated(
            x, w, window_strides=(1,), padding=((1, 1),),
            dimension_numbers=("NCH", "OIH", "NCH"))
        return out + b[None, :, None]

    h = conv1d(x, w1, b1)
    h = jnp.where(h > 0, h, LEAKY_SLOPE * h)
    return conv1d(h, w2, b2) + x


def _make_params(key, C):
    k1, k2, k3, k4 = jax.random.split(key, 4)
    bound = 1.0 / ((C * K) ** 0.5)
    w1 = jax.random.uniform(k1, (C, C, K), jnp.float32, -bound, bound)
    b1 = jax.random.uniform(k2, (C,), jnp.float32, -bound, bound)
    w2 = jax.random.uniform(k3, (C, C, K), jnp.float32, -bound, bound)
    b2 = jax.random.uniform(k4, (C,), jnp.float32, -bound, bound)
    return w1, b1, w2, b2


if __name__ == "__main__":
    key = jax.random.PRNGKey(0)
    kx1, kx2, kx3, kp = jax.random.split(key, 4)

    # 1) single-tile path (block = full length)
    N, C, L = 2, 8, 16
    w1, b1, w2, b2 = _make_params(kp, C)
    x = jax.random.normal(kx1, (N, C, L), dtype=jnp.float32)
    out = jax.block_until_ready(resblock(x, w1, b1, w2, b2))
    ref = resblock_ref(x, w1, b1, w2, b2)
    assert out.shape == (N, C, L)
    err = float(jnp.max(jnp.abs(out - ref)))
    assert jnp.allclose(out, ref, rtol=5e-4, atol=5e-4), f"single-tile err {err}"

    # 2) multi-tile path (halo BlockSpecs, TL=128, T=2)
    N2, L2 = 2, 256
    x2 = jax.random.normal(kx2, (N2, C, L2), dtype=jnp.float32)
    out2 = jax.block_until_ready(resblock(x2, w1, b1, w2, b2, tl_target=128))
    ref2 = resblock_ref(x2, w1, b1, w2, b2)
    assert out2.shape == (N2, C, L2)
    err2 = float(jnp.max(jnp.abs(out2 - ref2)))
    assert jnp.allclose(out2, ref2, rtol=5e-4, atol=5e-4), f"multi-tile err {err2}"

    # 3) ragged length (L not a 128-multiple): host pad + in-kernel mask + output slice
    L3 = 520
    x3 = jax.random.normal(kx3, (N2, C, L3), dtype=jnp.float32)
    out3 = jax.block_until_ready(resblock(x3, w1, b1, w2, b2, tl_target=128))
    ref3 = resblock_ref(x3, w1, b1, w2, b2)
    assert out3.shape == (N2, C, L3)
    err3 = float(jnp.max(jnp.abs(out3 - ref3)))
    assert jnp.allclose(out3, ref3, rtol=5e-4, atol=5e-4), f"ragged err {err3}"

    # 4) opt-in bf16 MXU path (f32 accumulation) — looser tolerance
    out4 = jax.block_until_ready(
        resblock(x2, w1, b1, w2, b2, tl_target=128, use_bf16=True))
    err4 = float(jnp.max(jnp.abs(out4 - ref2)))
    assert jnp.allclose(out4, ref2, rtol=5e-2, atol=5e-2), f"bf16 err {err4}"

    print("KERNEL_OK")
</pallas_src>

<mosaic_0001>
module attributes {stable_mosaic.version = 11 : i64} {
  func.func @compute_single(%arg0: i32, %arg1: i32, %arg2: memref<1x8x16xf32, #tpu.memory_space<vmem>>, %arg3: memref<3x8x8xf32, #tpu.memory_space<vmem>>, %arg4: memref<8x1xf32, #tpu.memory_space<vmem>>, %arg5: memref<3x8x8xf32, #tpu.memory_space<vmem>>, %arg6: memref<8x1xf32, #tpu.memory_space<vmem>>, %arg7: memref<1x8x16xf32, #tpu.memory_space<vmem>>) attributes {dimension_semantics = [#tpu.dimension_semantics<parallel>, #tpu.dimension_semantics<parallel>], iteration_bounds = array<i64: 2, 1>, scalar_prefetch = 0 : i64, scratch_operands = 0 : i64, tpu.core_type = #tpu.core_type<tc>, window_params = [{transform_indices = @transform_0, window_bounds = array<i64: 1, 8, 16>}, {pipeline_mode = #tpu.pipeline_mode<synchronous>, transform_indices = @transform_1, window_bounds = array<i64: 3, 8, 8>}, {pipeline_mode = #tpu.pipeline_mode<synchronous>, transform_indices = @transform_2, window_bounds = array<i64: 8, 1>}, {pipeline_mode = #tpu.pipeline_mode<synchronous>, transform_indices = @transform_3, window_bounds = array<i64: 3, 8, 8>}, {pipeline_mode = #tpu.pipeline_mode<synchronous>, transform_indices = @transform_4, window_bounds = array<i64: 8, 1>}, {transform_indices = @transform_5, window_bounds = array<i64: 1, 8, 16>}]} {
    %c0 = arith.constant 0 : index
    %c0_0 = arith.constant 0 : index
    %c0_1 = arith.constant 0 : index
    %0 = vector.load %arg2[%c0, %c0_0, %c0_1] : memref<1x8x16xf32, #tpu.memory_space<vmem>>, vector<1x8x16xf32>
    %1 = vector.shape_cast %0 : vector<1x8x16xf32> to vector<8x16xf32>
    %cst = arith.constant 0.000000e+00 : f32
    %2 = vector.broadcast %cst : f32 to vector<8x2xf32>
    %cst_2 = arith.constant 0.000000e+00 : f32
    %3 = vector.broadcast %cst_2 : f32 to vector<8x2xf32>
    %c0_3 = arith.constant 0 : index
    %c0_4 = arith.constant 0 : index
    %c0_5 = arith.constant 0 : index
    %4 = vector.load %arg3[%c0_3, %c0_4, %c0_5] : memref<3x8x8xf32, #tpu.memory_space<vmem>>, vector<1x8x8xf32>
    %5 = vector.shape_cast %4 : vector<1x8x8xf32> to vector<8x8xf32>
    %c1 = arith.constant 1 : index
    %c0_6 = arith.constant 0 : index
    %c0_7 = arith.constant 0 : index
    %6 = vector.load %arg3[%c1, %c0_6, %c0_7] : memref<3x8x8xf32, #tpu.memory_space<vmem>>, vector<1x8x8xf32>
    %7 = vector.shape_cast %6 : vector<1x8x8xf32> to vector<8x8xf32>
    %c2 = arith.constant 2 : index
    %c0_8 = arith.constant 0 : index
    %c0_9 = arith.constant 0 : index
    %8 = vector.load %arg3[%c2, %c0_8, %c0_9] : memref<3x8x8xf32, #tpu.memory_space<vmem>>, vector<1x8x8xf32>
    %9 = vector.shape_cast %8 : vector<1x8x8xf32> to vector<8x8xf32>
    %c0_10 = arith.constant 0 : index
    %c0_11 = arith.constant 0 : index
    %10 = vector.load %arg4[%c0_10, %c0_11] : memref<8x1xf32, #tpu.memory_space<vmem>>, vector<8x1xf32>
    %11 = vector.extract_strided_slice %2 {offsets = [0, 1], sizes = [8, 1], strides = [1, 1]} : vector<8x2xf32> to vector<8x1xf32>
    %12 = vector.extract_strided_slice %1 {offsets = [0, 0], sizes = [8, 15], strides = [1, 1]} : vector<8x16xf32> to vector<8x15xf32>
    %13 = tpu.concatenate %11, %12 in 1 : vector<8x1xf32>, vector<8x15xf32> -> vector<8x16xf32>
    %14 = vector.extract_strided_slice %1 {offsets = [0, 1], sizes = [8, 15], strides = [1, 1]} : vector<8x16xf32> to vector<8x15xf32>
    %15 = vector.extract_strided_slice %3 {offsets = [0, 0], sizes = [8, 1], strides = [1, 1]} : vector<8x2xf32> to vector<8x1xf32>
    %16 = tpu.concatenate %14, %15 in 1 : vector<8x15xf32>, vector<8x1xf32> -> vector<8x16xf32>
    %cst_12 = arith.constant dense<0.000000e+00> : vector<8x16xf32>
    %17 = tpu.matmul %5, %13, %cst_12 {dimension_numbers = #tpu.dot_dimension_numbers<[1], [0], [0], [1], [0, 0, 1, 1], [], []>} : vector<8x8xf32>, vector<8x16xf32>, vector<8x16xf32> -> vector<8x16xf32>
    %cst_13 = arith.constant dense<0.000000e+00> : vector<8x16xf32>
    %18 = tpu.matmul %7, %1, %cst_13 {dimension_numbers = #tpu.dot_dimension_numbers<[1], [0], [0], [1], [0, 0, 1, 1], [], []>} : vector<8x8xf32>, vector<8x16xf32>, vector<8x16xf32> -> vector<8x16xf32>
    %19 = arith.addf %17, %18 : vector<8x16xf32>
    %cst_14 = arith.constant dense<0.000000e+00> : vector<8x16xf32>
    %20 = tpu.matmul %9, %16, %cst_14 {dimension_numbers = #tpu.dot_dimension_numbers<[1], [0], [0], [1], [0, 0, 1, 1], [], []>} : vector<8x8xf32>, vector<8x16xf32>, vector<8x16xf32> -> vector<8x16xf32>
    %21 = arith.addf %19, %20 : vector<8x16xf32>
    %22 = vector.broadcast %10 : vector<8x1xf32> to vector<8x16xf32>
    %23 = arith.addf %21, %22 : vector<8x16xf32>
    %cst_15 = arith.constant 0.000000e+00 : f32
    %24 = vector.broadcast %cst_15 : f32 to vector<8x16xf32>
    %25 = arith.cmpf ogt, %23, %24 : vector<8x16xf32>
    %cst_16 = arith.constant 2.000000e-01 : f32
    %26 = vector.broadcast %cst_16 : f32 to vector<8x16xf32>
    %27 = arith.mulf %26, %23 : vector<8x16xf32>
    %28 = arith.select %25, %23, %27 : vector<8x16xi1>, vector<8x16xf32>
    %cst_17 = arith.constant 0.000000e+00 : f32
    %29 = vector.broadcast %cst_17 : f32 to vector<8x1xf32>
    %cst_18 = arith.constant 0.000000e+00 : f32
    %30 = vector.broadcast %cst_18 : f32 to vector<8x1xf32>
    %31 = vector.extract_strided_slice %28 {offsets = [0, 0], sizes = [8, 15], strides = [1, 1]} : vector<8x16xf32> to vector<8x15xf32>
    %32 = tpu.concatenate %29, %31 in 1 : vector<8x1xf32>, vector<8x15xf32> -> vector<8x16xf32>
    %33 = vector.extract_strided_slice %28 {offsets = [0, 1], sizes = [8, 15], strides = [1, 1]} : vector<8x16xf32> to vector<8x15xf32>
    %34 = tpu.concatenate %33, %30 in 1 : vector<8x15xf32>, vector<8x1xf32> -> vector<8x16xf32>
    %c0_19 = arith.constant 0 : index
    %c0_20 = arith.constant 0 : index
    %c0_21 = arith.constant 0 : index
    %35 = vector.load %arg5[%c0_19, %c0_20, %c0_21] : memref<3x8x8xf32, #tpu.memory_space<vmem>>, vector<1x8x8xf32>
    %36 = vector.shape_cast %35 : vector<1x8x8xf32> to vector<8x8xf32>
    %cst_22 = arith.constant dense<0.000000e+00> : vector<8x16xf32>
    %37 = tpu.matmul %36, %32, %cst_22 {dimension_numbers = #tpu.dot_dimension_numbers<[1], [0], [0], [1], [0, 0, 1, 1], [], []>} : vector<8x8xf32>, vector<8x16xf32>, vector<8x16xf32> -> vector<8x16xf32>
    %c1_23 = arith.constant 1 : index
    %c0_24 = arith.constant 0 : index
    %c0_25 = arith.constant 0 : index
    %38 = vector.load %arg5[%c1_23, %c0_24, %c0_25] : memref<3x8x8xf32, #tpu.memory_space<vmem>>, vector<1x8x8xf32>
    %39 = vector.shape_cast %38 : vector<1x8x8xf32> to vector<8x8xf32>
    %cst_26 = arith.constant dense<0.000000e+00> : vector<8x16xf32>
    %40 = tpu.matmul %39, %28, %cst_26 {dimension_numbers = #tpu.dot_dimension_numbers<[1], [0], [0], [1], [0, 0, 1, 1], [], []>} : vector<8x8xf32>, vector<8x16xf32>, vector<8x16xf32> -> vector<8x16xf32>
    %41 = arith.addf %37, %40 : vector<8x16xf32>
    %c2_27 = arith.constant 2 : index
    %c0_28 = arith.constant 0 : index
    %c0_29 = arith.constant 0 : index
    %42 = vector.load %arg5[%c2_27, %c0_28, %c0_29] : memref<3x8x8xf32, #tpu.memory_space<vmem>>, vector<1x8x8xf32>
    %43 = vector.shape_cast %42 : vector<1x8x8xf32> to vector<8x8xf32>
    %cst_30 = arith.constant dense<0.000000e+00> : vector<8x16xf32>
    %44 = tpu.matmul %43, %34, %cst_30 {dimension_numbers = #tpu.dot_dimension_numbers<[1], [0], [0], [1], [0, 0, 1, 1], [], []>} : vector<8x8xf32>, vector<8x16xf32>, vector<8x16xf32> -> vector<8x16xf32>
    %45 = arith.addf %41, %44 : vector<8x16xf32>
    %c0_31 = arith.constant 0 : index
    %c0_32 = arith.constant 0 : index
    %46 = vector.load %arg6[%c0_31, %c0_32] : memref<8x1xf32, #tpu.memory_space<vmem>>, vector<8x1xf32>
    %47 = vector.broadcast %46 : vector<8x1xf32> to vector<8x16xf32>
    %48 = arith.addf %45, %47 : vector<8x16xf32>
    %49 = arith.addf %48, %1 : vector<8x16xf32>
    %c0_33 = arith.constant 0 : index
    %c0_34 = arith.constant 0 : index
    %c0_35 = arith.constant 0 : index
    %50 = vector.load %arg7[%c0_33, %c0_34, %c0_35] : memref<1x8x16xf32, #tpu.memory_space<vmem>>, vector<1x8x16xf32>
    %51 = vector.shape_cast %50 : vector<1x8x16xf32> to vector<8x16xf32>
    %52 = vector.shape_cast %49 : vector<8x16xf32> to vector<1x8x16xf32>
    tpu.vector_store %arg7[%c0_33, %c0_34, %c0_35], %52 {strides = array<i32>} : memref<1x8x16xf32, #tpu.memory_space<vmem>>, vector<1x8x16xf32>,
    return
  }
  func.func @transform_0(%arg0: i32, %arg1: i32) -> (i32, i32, i32) {
    %c0_i32 = arith.constant 0 : i32
    %c0_i32_0 = arith.constant 0 : i32
    %c0_i32_1 = arith.constant 0 : i32
    return %arg0, %c0_i32, %c0_i32_0 : i32, i32, i32
  }
  func.func @transform_1(%arg0: i32, %arg1: i32) -> (i32, i32, i32) {
    %c0_i32 = arith.constant 0 : i32
    %c0_i32_0 = arith.constant 0 : i32
    %c0_i32_1 = arith.constant 0 : i32
    %c0_i32_2 = arith.constant 0 : i32
    return %c0_i32, %c0_i32_0, %c0_i32_1 : i32, i32, i32
  }
  func.func @transform_2(%arg0: i32, %arg1: i32) -> (i32, i32) {
    %c0_i32 = arith.constant 0 : i32
    %c0_i32_0 = arith.constant 0 : i32
    %c0_i32_1 = arith.constant 0 : i32
    return %c0_i32, %c0_i32_0 : i32, i32
  }
  func.func @transform_3(%arg0: i32, %arg1: i32) -> (i32, i32, i32) {
    %c0_i32 = arith.constant 0 : i32
    %c0_i32_0 = arith.constant 0 : i32
    %c0_i32_1 = arith.constant 0 : i32
    %c0_i32_2 = arith.constant 0 : i32
    return %c0_i32, %c0_i32_0, %c0_i32_1 : i32, i32, i32
  }
  func.func @transform_4(%arg0: i32, %arg1: i32) -> (i32, i32) {
    %c0_i32 = arith.constant 0 : i32
    %c0_i32_0 = arith.constant 0 : i32
    %c0_i32_1 = arith.constant 0 : i32
    return %c0_i32, %c0_i32_0 : i32, i32
  }
  func.func @transform_5(%arg0: i32, %arg1: i32) -> (i32, i32, i32) {
    %c0_i32 = arith.constant 0 : i32
    %c0_i32_0 = arith.constant 0 : i32
    return %arg0, %c0_i32, %arg1 : i32, i32, i32
  }
}

</mosaic_0001>

<llo_original>
// kernel: tpu_custom_call.1
$region0: #{tpu_custom_call.1}
  #allocation0 [shape = 'u32[]', space=smem, size = 0x4, offset = 0x4, fixed_abs, tag = 'smem constant byte address 0x4 - core index']
  #allocation1 [shape = 'u32[144,128]{1,0:T(1,128)}', space=vmem, size = 0x12000, scoped, tag = 'internal scratch']
  %s0 = inlined_call_operand.hbm [shape: f32[2,8,16], index: 0, kind: input, shape index: {}]
  %s1 = inlined_call_operand.hbm [shape: f32[3,8,8], index: 1, kind: input, shape index: {}]
  %s2 = inlined_call_operand.vmem [shape: f32[8,1], index: 2, kind: input, shape index: {}]
  %s3 = inlined_call_operand.vmem [shape: f32[3,8,8], index: 3, kind: input, shape index: {}]
  %s4 = inlined_call_operand.vmem [shape: f32[8,1], index: 4, kind: input, shape index: {}]
  %s5 = inlined_call_operand.hbm [shape: f32[2,8,16], index: 5, kind: output, shape index: {}]
  %s6 = sld [smem:[#allocation0]]
  $region61: #{tpu_custom_call.1} parent=0
    _
  %s8 = ssub.s32 1, %s6
  %s9 = scalar_select 0, %s8, %s6
  $region1: #{tpu_custom_call.1} parent=0
    #allocation2 [shape = 'u8[8192]{0}', space=vmem, size = 0x2000, scoped, tag = 'input window, operand 0']
    #allocation3 [shape = 's32[2]{0}', space=sflag, size = 0x8, scoped, tag = 'scoped memory for tpu_custom_call.1']
    #allocation4 [shape = 's32[2]{0}', space=sflag, size = 0x8, scoped, tag = 'scoped memory for tpu_custom_call.1']
    #allocation5 [shape = 'u8[12288]{0}', space=vmem, size = 0x3000, scoped, tag = 'input window, operand 1, single buffered']
    #allocation6 [shape = 's32[1]{0}', space=sflag, size = 0x4, scoped, tag = 'scoped memory for tpu_custom_call.1']
    #allocation7 [shape = 'u8[8192]{0}', space=vmem, size = 0x2000, scoped, tag = 'output window, operand 0']
    %10 = vsyncpa [#allocation3], 0
    %s11 = scalar_lea.sflag [#allocation3], 1
    %12 = vsyncpa %s11, 0
    %13 = vsyncpa [#allocation6], 0
    %14 = vsyncpa [#allocation4], 0
    %s15 = scalar_lea.sflag [#allocation4], 1
    %16 = vsyncpa %s15, 0
    loop: start=0, step=1, limit=4
    $region2: #{tpu_custom_call.1} parent=1 // loop_pre_header
      _
    $region3: #{tpu_custom_call.1} parent=1 // loop_header
      %s18 = sphi 0, %s22
      %p19 = scmp.ge.s32.totalorder %s18, 4
      %s25 = sphi 0, %s37
      %s26 = sphi 0, %s33
      %s27 = sphi 0, %s25
      %s28 = sphi 0, %s26
      %s29 = sphi 0, %s27
      %s30 = sphi 0, %s28
      %s40 = sphi 0, %s42
      %s43 = sphi 0, %s40
      %s44 = sphi 0, %s43
      %s60 = sphi 0, %s44
      %s64 = sphi 0, %s64
      %s66 = sphi 0, %s64
      %s67 = sphi 0, %s66
      %s81 = sphi 0, %s67
      %s85 = sphi 0, %s85
      %s87 = sphi 0, %s85
      %s88 = sphi 0, %s87
      %s102 = sphi 0, %s88
      %s106 = sphi 0, %s106
      %s108 = sphi 0, %s106
      %s109 = sphi 0, %s108
      %s123 = sphi 0, %s109
      %s127 = sphi 0, %s127
      %s129 = sphi 0, %s127
      %s130 = sphi 0, %s129
      %s144 = sphi 0, %s130
      %s152 = sphi 0, %s154
      %s155 = sphi 0, %s152
      %s156 = sphi 0, %s155
      %s172 = sphi 0, %s156
    $region4: #{tpu_custom_call.1} parent=1 // loop_header_branch
      %21 = sbr.rel (%p19) target = $region8
    $region5: #{tpu_custom_call.1} parent=1 // loop_body
      %s23 = ssub.s32 %s18, 1
      %s24 = ssub.s32 %s18, 2
      %s31 = sadd.s32 1, %s26
      %p32 = scmp.ge.s32.totalorder %s31, 1
      %s33 = scalar_select %p32, 0, %s31
      %s34 = sadd.s32 1, %s25
      %s35 = scalar_select %p32, %s34, %s25
      %p36 = scmp.ge.s32.totalorder %s35, 2
      %s37 = scalar_select %p36, 0, %s35
      %s38 = ssub.s32 %s25, %s37
      %p39 = scmp.eq.s32.totalorder %s38, 0
      %s41 = sadd.s32 %s40, 1
      %s42 = scalar_select %p39, %s40, %s41
      %p45 = pneg %p39
      %p46 = scmp.eq.s32.totalorder %s18, 1
      %p47 = por %p45, %p46
      %p48 = scmp.ne.s32.totalorder %s40, %s43
      %p49 = scmp.eq.s32.totalorder %s18, 0
      %p50 = por %p48, %p49
      %p51 = scmp.ne.s32.totalorder %s40, %s43
      %p52 = scmp.eq.s32.totalorder %s23, 1
      %p53 = por %p51, %p52
      %p54 = scmp.ne.s32.totalorder %s43, %s44
      %p55 = scmp.eq.s32.totalorder %s23, 0
      %p56 = por %p54, %p55
      %p57 = scmp.ne.s32.totalorder %s43, %s44
      %p58 = scmp.eq.s32.totalorder %s24, 1
      %p59 = por %p57, %p58
      %p61 = scmp.ne.s32.totalorder %s44, %s60
      %p62 = scmp.eq.s32.totalorder %s24, 0
      %p63 = por %p61, %p62
      %s65 = sadd.s32 %s64, 1
      %p68 = scmp.eq.s32.totalorder %s18, 1
      %p69 = scmp.ne.s32.totalorder %s64, %s66
      %p70 = scmp.eq.s32.totalorder %s18, 0
      %p71 = por %p69, %p70
      %p72 = scmp.ne.s32.totalorder %s64, %s66
      %p73 = scmp.eq.s32.totalorder %s23, 1
      %p74 = por %p72, %p73
      %p75 = scmp.ne.s32.totalorder %s66, %s67
      %p76 = scmp.eq.s32.totalorder %s23, 0
      %p77 = por %p75, %p76
      %p78 = scmp.ne.s32.totalorder %s66, %s67
      %p79 = scmp.eq.s32.totalorder %s24, 1
      %p80 = por %p78, %p79
      %p82 = scmp.ne.s32.totalorder %s67, %s81
      %p83 = scmp.eq.s32.totalorder %s24, 0
      %p84 = por %p82, %p83
      %s86 = sadd.s32 %s85, 1
      %p89 = scmp.eq.s32.totalorder %s18, 1
      %p90 = scmp.ne.s32.totalorder %s85, %s87
      %p91 = scmp.eq.s32.totalorder %s18, 0
      %p92 = por %p90, %p91
      %p93 = scmp.ne.s32.totalorder %s85, %s87
      %p94 = scmp.eq.s32.totalorder %s23, 1
      %p95 = por %p93, %p94
      %p96 = scmp.ne.s32.totalorder %s87, %s88
      %p97 = scmp.eq.s32.totalorder %s23, 0
      %p98 = por %p96, %p97
      %p99 = scmp.ne.s32.totalorder %s87, %s88
      %p100 = scmp.eq.s32.totalorder %s24, 1
      %p101 = por %p99, %p100
      %p103 = scmp.ne.s32.totalorder %s88, %s102
      %p104 = scmp.eq.s32.totalorder %s24, 0
      %p105 = por %p103, %p104
      %s107 = sadd.s32 %s106, 1
      %p110 = scmp.eq.s32.totalorder %s18, 1
      %p111 = scmp.ne.s32.totalorder %s106, %s108
      %p112 = scmp.eq.s32.totalorder %s18, 0
      %p113 = por %p111, %p112
      %p114 = scmp.ne.s32.totalorder %s106, %s108
      %p115 = scmp.eq.s32.totalorder %s23, 1
      %p116 = por %p114, %p115
      %p117 = scmp.ne.s32.totalorder %s108, %s109
      %p118 = scmp.eq.s32.totalorder %s23, 0
      %p119 = por %p117, %p118
      %p120 = scmp.ne.s32.totalorder %s108, %s109
      %p121 = scmp.eq.s32.totalorder %s24, 1
      %p122 = por %p120, %p121
      %p124 = scmp.ne.s32.totalorder %s109, %s123
      %p125 = scmp.eq.s32.totalorder %s24, 0
      %p126 = por %p124, %p125
      %s128 = sadd.s32 %s127, 1
      %p131 = scmp.eq.s32.totalorder %s18, 1
      %p132 = scmp.ne.s32.totalorder %s127, %s129
      %p133 = scmp.eq.s32.totalorder %s18, 0
      %p134 = por %p132, %p133
      %p135 = scmp.ne.s32.totalorder %s127, %s129
      %p136 = scmp.eq.s32.totalorder %s23, 1
      %p137 = por %p135, %p136
      %p138 = scmp.ne.s32.totalorder %s129, %s130
      %p139 = scmp.eq.s32.totalorder %s23, 0
      %p140 = por %p138, %p139
      %p141 = scmp.ne.s32.totalorder %s129, %s130
      %p142 = scmp.eq.s32.totalorder %s24, 1
      %p143 = por %p141, %p142
      %p145 = scmp.ne.s32.totalorder %s130, %s144
      %p146 = scmp.eq.s32.totalorder %s24, 0
      %p147 = por %p145, %p146
      %s148 = ssub.s32 %s25, %s37
      %s149 = ssub.s32 %s26, %s33
      %s150 = sor.u32 %s148, %s149
      %p151 = scmp.eq.s32.totalorder %s150, 0
      %s153 = sadd.s32 %s152, 1
      %s154 = scalar_select %p151, %s152, %s153
      %p157 = pneg %p151
      %p158 = scmp.eq.s32.totalorder %s18, 1
      %p159 = por %p157, %p158
      %p160 = scmp.ne.s32.totalorder %s152, %s155
      %p161 = scmp.eq.s32.totalorder %s18, 0
      %p162 = por %p160, %p161
      %p163 = scmp.ne.s32.totalorder %s152, %s155
      %p164 = scmp.eq.s32.totalorder %s23, 1
      %p165 = por %p163, %p164
      %p166 = scmp.ne.s32.totalorder %s155, %s156
      %p167 = scmp.eq.s32.totalorder %s23, 0
      %p168 = por %p166, %p167
      %p169 = scmp.ne.s32.totalorder %s155, %s156
      %p170 = scmp.eq.s32.totalorder %s24, 1
      %p171 = por %p169, %p170
      %p173 = scmp.ne.s32.totalorder %s156, %s172
      %p174 = scmp.eq.s32.totalorder %s24, 0
      %p175 = por %p173, %p174
      %p176 = scmp.le.s32.totalorder 1, %s18
      %p177 = scmp.lt.s32.totalorder %s18, 3
      %p178 = pnand %p176, %p177
      %p179 = pneg %p178
      // Predicated region
      $region9: #{tpu_custom_call.1} parent=5 // pred_check
        _
      $region10: #{tpu_custom_call.1} parent=5 // pred_check_branch
        %181 = sbr.rel (%p178) target = $region12
      $region11: #{tpu_custom_call.1} parent=5 // pred_region
        %s182 = ssub.s32 %s18, 1
        // Predicated region
        $region13: #{tpu_custom_call.1} parent=11 // pred_check
          %p183 = pneg %p77
        $region14: #{tpu_custom_call.1} parent=11 // pred_check_branch
          %185 = sbr.rel (%p183) target = $region16
        $region15: #{tpu_custom_call.1} parent=11 // pred_region
          %s187 = ssub.s32 384, 384
          %188 = vsyncadd [#allocation6], %s187
          %s189 = sshll.u32 [#allocation5], 4
          %s190 = int_to_ptr.vmem [resolvable:$true] %s189
          %195 = dma.hbm_to_vmem [thread:$0]  %s1, 384, %s190, [#allocation6], 128, 128, 8
        $region16: #{tpu_custom_call.1} parent=11 // pred_fallthru
          _
        // Predicated region
        $region17: #{tpu_custom_call.1} parent=11 // pred_check
          %p196 = pneg %p98
        $region18: #{tpu_custom_call.1} parent=11 // pred_check_branch
          %198 = sbr.rel (%p196) target = $region20
        $region19: #{tpu_custom_call.1} parent=11 // pred_region
          _
        $region20: #{tpu_custom_call.1} parent=11 // pred_fallthru
          _
        // Predicated region
        $region21: #{tpu_custom_call.1} parent=11 // pred_check
          %p199 = pneg %p119
        $region22: #{tpu_custom_call.1} parent=11 // pred_check_branch
          %201 = sbr.rel (%p199) target = $region24
        $region23: #{tpu_custom_call.1} parent=11 // pred_region
          _
        $region24: #{tpu_custom_call.1} parent=11 // pred_fallthru
          _
        // Predicated region
        $region25: #{tpu_custom_call.1} parent=11 // pred_check
          %p202 = pneg %p140
        $region26: #{tpu_custom_call.1} parent=11 // pred_check_branch
          %204 = sbr.rel (%p202) target = $region28
        $region27: #{tpu_custom_call.1} parent=11 // pred_region
          _
        $region28: #{tpu_custom_call.1} parent=11 // pred_fallthru
          _
      $region12: #{tpu_custom_call.1} parent=5 // pred_fallthru
        _
      %p205 = scmp.lt.s32.totalorder %s18, 2
      // Predicated region
      $region29: #{tpu_custom_call.1} parent=5 // pred_check
        %p206 = pneg %p205
      $region30: #{tpu_custom_call.1} parent=5 // pred_check_branch
        %208 = sbr.rel (%p206) target = $region32
      $region31: #{tpu_custom_call.1} parent=5 // pred_region
        // Predicated region
        $region33: #{tpu_custom_call.1} parent=31 // pred_check
          %p209 = pneg %p50
        $region34: #{tpu_custom_call.1} parent=31 // pred_check_branch
          %211 = sbr.rel (%p209) target = $region36
        $region35: #{tpu_custom_call.1} parent=31 // pred_region
          %s212 = sand.u32 %s40, 1
          %s213 = scalar_lea.sflag [#allocation3], %s212
          %s214 = sand.u32 %s40, 1
          %s215 = smul.addr %s214, 8
          %s216 = scalar_lea.vmem [#allocation2], %s215
          %s218 = ssub.s32 128, 128
          %219 = vsyncadd %s213, %s218
          %s220 = smul.addr %s25, 128
          %s221 = scalar_lea.hbm %s0, %s220
          %s223 = sshll.u32 %s216, 4
          %s224 = int_to_ptr.vmem [resolvable:$true] %s223
          %226 = dma.hbm_to_vmem [thread:$0]  %s221, 128, %s224, %s213
        $region36: #{tpu_custom_call.1} parent=31 // pred_fallthru
          _
      $region32: #{tpu_custom_call.1} parent=5 // pred_fallthru
        _
      %p227 = scmp.le.s32.totalorder 1, %s18
      %p228 = scmp.lt.s32.totalorder %s18, 3
      %p229 = pnand %p227, %p228
      %p230 = pneg %p229
      // Predicated region
      $region37: #{tpu_custom_call.1} parent=5 // pred_check
        _
      $region38: #{tpu_custom_call.1} parent=5 // pred_check_branch
        %232 = sbr.rel (%p229) target = $region40
      $region39: #{tpu_custom_call.1} parent=5 // pred_region
        %s233 = ssub.s32 %s18, 1
        %s234 = sand.u32 %s43, 1
        %s235 = scalar_lea.sflag [#allocation3], %s234
        %s236 = sand.u32 %s43, 1
        %s237 = smul.addr %s236, 8
        %s238 = scalar_lea.vmem [#allocation2], %s237
        // Predicated region
        $region41: #{tpu_custom_call.1} parent=39 // pred_check
          %p239 = pneg %p56
        $region42: #{tpu_custom_call.1} parent=39 // pred_check_branch
          %241 = sbr.rel (%p239) target = $region44
        $region43: #{tpu_custom_call.1} parent=39 // pred_region
          %242 = dma.done %s235, 128
        $region44: #{tpu_custom_call.1} parent=39 // pred_fallthru
          _
        // Predicated region
        $region45: #{tpu_custom_call.1} parent=39 // pred_check
          %p243 = pneg %p77
        $region46: #{tpu_custom_call.1} parent=39 // pred_check_branch
          %245 = sbr.rel (%p243) target = $region48
        $region47: #{tpu_custom_call.1} parent=39 // pred_region
          %246 = dma.done [#allocation6], 384
        $region48: #{tpu_custom_call.1} parent=39 // pred_fallthru
          _
        %s247 = sand.u32 %s43, 1
        %s248 = scalar_lea.sflag [#allocation3], %s247
        %s249 = sand.u32 %s43, 1
        %s250 = smul.addr %s249, 8
        %s251 = scalar_lea.vmem [#allocation2], %s250
        %p252 = pneg %p56
        %p253 = pneg %p53
        %p254 = pneg %p77
        %p255 = pneg %p74
        %p256 = pneg %p98
        %p257 = pneg %p95
        %p258 = pneg %p119
        %p259 = pneg %p116
        %p260 = pneg %p140
        %p261 = pneg %p137
        %p262 = pneg %p168
        %p263 = pneg %p165
        %s264 = sand.u32 %s155, 1
        %s265 = scalar_lea.sflag [#allocation4], %s264
        %s266 = sand.u32 %s155, 1
        %s267 = smul.addr %s266, 8
        %s268 = scalar_lea.vmem [#allocation7], %s267
        %v269 = vld [vmem:[%s238] sm:$0xff]
        %v270 = vld [vmem:[#allocation5] sm:$0xff]
        %s271 = scalar_lea.vmem [#allocation5], 8
        %v272 = vld [vmem:[%s271] sm:$0xff]
        %s273 = scalar_lea.vmem [#allocation5], 16
        %v274 = vld [vmem:[%s273] sm:$0xff]
        %v275 = vld [vmem:[%s2] sm:$0xff]
        %277 = vrot.lane.b32.xlu0 %v269, 1
        %v278 = vpop.permute.xlu0 %277
        %vm280 = vcmask 7168
        %v281 = vsel %vm280, 0.0, %v278
        %282 = vrot.lane.b32.xlu0 %v269, 127
        %v283 = vpop.permute.xlu0 %282
        %vm285 = vcmask 121856
        %v286 = vsel %vm285, %v283, 0.0
        %vm287 = vcmask 64512
        %v289 = vsel %vm287, %v272, 0
        %291 = vmatprep.subr.mxu0 0.0
        %292 = vmatpush1.msra.mxu0 %v269
        %293 = vmatprep.subr.mxu0 0.0
        %294 = vmatpush1.msra.mxu0 0.0
        %295 = vmatprep.subr.mxu0 0.0
        %296 = vmatpush1.msra.mxu0 0.0
        %297 = vmatprep.subr.mxu0 0.0
        %298 = vmatpush1.msra.mxu0 0.0
        %299 = vmatprep.subr.mxu0 0.0
        %300 = vmatpush1.msra.mxu0 0.0
        %301 = vmatprep.subr.mxu0 0.0
        %302 = vmatpush1.msra.mxu0 0.0
        %303 = vmatprep.subr.mxu0 0.0
        %304 = vmatpush1.msra.mxu0 0.0
        %305 = vmatprep.subr.mxu0 0.0
        %306 = vmatpush1.msra.mxu0 0.0
        %307 = vmatprep.subr.mxu0 0.0
        %308 = vmatpush1.msra.mxu0 0.0
        %309 = vmatprep.subr.mxu0 0.0
        %310 = vmatpush1.msra.mxu0 0.0
        %311 = vmatprep.subr.mxu0 0.0
        %312 = vmatpush1.msra.mxu0 0.0
        %313 = vmatprep.subr.mxu0 0.0
        %314 = vmatpush1.msra.mxu0 0.0
        %315 = vmatprep.subr.mxu0 0.0
        %316 = vmatpush1.msra.mxu0 0.0
        %317 = vmatprep.subr.mxu0 0.0
        %318 = vmatpush1.msra.mxu0 0.0
        %319 = vmatprep.subr.mxu0 0.0
        %320 = vmatpush1.msra.mxu0 0.0
        %321 = vmatprep.subr.mxu0 0.0
        %322 = vmatpush1.msra.mxu0 0.0
        %323 = vmatprep.subr.mxu0 0.0
        %324 = vmatpush1.msra.mxu0 0.0
        %325 = vmatprep.subr.mxu0 0.0
        %326 = vmatpush1.msra.mxu0 0.0
        %327 = vmatprep.subr.mxu0 0.0
        %328 = vmatpush1.msra.mxu0 0.0
        %329 = vmatprep.subr.mxu0 0.0
        %330 = vmatpush1.msra.mxu0 0.0
        %331 = vmatprep.subr.mxu0 0.0
        %332 = vmatpush1.msra.mxu0 0.0
        %333 = vmatprep.subr.mxu0 0.0
        %334 = vmatpush1.msra.mxu0 0.0
        %335 = vmatprep.subr.mxu0 0.0
        %336 = vmatpush1.msra.mxu0 0.0
        %337 = vmatprep.subr.mxu0 0.0
        %338 = vmatpush1.msra.mxu0 0.0
        %339 = vmatprep.subr.mxu0 0.0
        %340 = vmatpush1.msra.mxu0 0.0
        %341 = vmatprep.subr.mxu0 0.0
        %342 = vmatpush1.msra.mxu0 0.0
        %343 = vmatprep.subr.mxu0 0.0
        %344 = vmatpush1.msra.mxu0 0.0
        %345 = vmatprep.subr.mxu0 0.0
        %346 = vmatpush1.msra.mxu0 0.0
        %347 = vmatprep.subr.mxu0 0.0
        %348 = vmatpush1.msra.mxu0 0.0
        %349 = vmatprep.subr.mxu0 0.0
        %350 = vmatpush1.msra.mxu0 0.0
        %351 = vmatprep.subr.mxu0 0.0
        %352 = vmatpush1.msra.mxu0 0.0
        %353 = vmatprep.subr.mxu0 0.0
        %354 = vmatpush1.msra.mxu0 0.0
        %355 = vmatprep.mubr.f32.mxu0 0.0
        %356 = vmatmul.mubr.f32.gmra.mrb[0].mxu0 %v289
        %v357 = vpop.f32.mrb[0].mxu0
        %v358 = vadd.f32 0.0, %v357
        %v359 = vpop.f32.mrb[0].mxu0
        %360 = vdwg.mxu0
        %v362 = vsel %vm287, %v270, 0
        %364 = vmatprep.subr.mxu0 0.0
        %365 = vmatpush1.msra.mxu0 %v281
        %366 = vmatprep.subr.mxu0 0.0
        %367 = vmatpush1.msra.mxu0 0.0
        %368 = vmatprep.subr.mxu0 0.0
        %369 = vmatpush1.msra.mxu0 0.0
        %370 = vmatprep.subr.mxu0 0.0
        %371 = vmatpush1.msra.mxu0 0.0
        %372 = vmatprep.subr.mxu0 0.0
        %373 = vmatpush1.msra.mxu0 0.0
        %374 = vmatprep.subr.mxu0 0.0
        %375 = vmatpush1.msra.mxu0 0.0
        %376 = vmatprep.subr.mxu0 0.0
        %377 = vmatpush1.msra.mxu0 0.0
        %378 = vmatprep.subr.mxu0 0.0
        %379 = vmatpush1.msra.mxu0 0.0
        %380 = vmatprep.subr.mxu0 0.0
        %381 = vmatpush1.msra.mxu0 0.0
        %382 = vmatprep.subr.mxu0 0.0
        %383 = vmatpush1.msra.mxu0 0.0
        %384 = vmatprep.subr.mxu0 0.0
        %385 = vmatpush1.msra.mxu0 0.0
        %386 = vmatprep.subr.mxu0 0.0
        %387 = vmatpush1.msra.mxu0 0.0
        %388 = vmatprep.subr.mxu0 0.0
        %389 = vmatpush1.msra.mxu0 0.0
        %390 = vmatprep.subr.mxu0 0.0
        %391 = vmatpush1.msra.mxu0 0.0
        %392 = vmatprep.subr.mxu0 0.0
        %393 = vmatpush1.msra.mxu0 0.0
        %394 = vmatprep.subr.mxu0 0.0
        %395 = vmatpush1.msra.mxu0 0.0
        %396 = vmatprep.subr.mxu0 0.0
        %397 = vmatpush1.msra.mxu0 0.0
        %398 = vmatprep.subr.mxu0 0.0
        %399 = vmatpush1.msra.mxu0 0.0
        %400 = vmatprep.subr.mxu0 0.0
        %401 = vmatpush1.msra.mxu0 0.0
        %402 = vmatprep.subr.mxu0 0.0
        %403 = vmatpush1.msra.mxu0 0.0
        %404 = vmatprep.subr.mxu0 0.0
        %405 = vmatpush1.msra.mxu0 0.0
        %406 = vmatprep.subr.mxu0 0.0
        %407 = vmatpush1.msra.mxu0 0.0
        %408 = vmatprep.subr.mxu0 0.0
        %409 = vmatpush1.msra.mxu0 0.0
        %410 = vmatprep.subr.mxu0 0.0
        %411 = vmatpush1.msra.mxu0 0.0
        %412 = vmatprep.subr.mxu0 0.0
        %413 = vmatpush1.msra.mxu0 0.0
        %414 = vmatprep.subr.mxu0 0.0
        %415 = vmatpush1.msra.mxu0 0.0
        %416 = vmatprep.subr.mxu0 0.0
        %417 = vmatpush1.msra.mxu0 0.0
        %418 = vmatprep.subr.mxu0 0.0
        %419 = vmatpush1.msra.mxu0 0.0
        %420 = vmatprep.subr.mxu0 0.0
        %421 = vmatpush1.msra.mxu0 0.0
        %422 = vmatprep.subr.mxu0 0.0
        %423 = vmatpush1.msra.mxu0 0.0
        %424 = vmatprep.subr.mxu0 0.0
        %425 = vmatpush1.msra.mxu0 0.0
        %426 = vmatprep.subr.mxu0 0.0
        %427 = vmatpush1.msra.mxu0 0.0
        %428 = vmatprep.mubr.f32.mxu0 0.0
        %429 = vmatmul.mubr.f32.gmra.mrb[0].mxu0 %v362
        %v430 = vpop.f32.mrb[0].mxu0
        %v431 = vadd.f32 %v358, %v430
        %v432 = vpop.f32.mrb[0].mxu0
        %433 = vdwg.mxu0
        %v435 = vsel %vm287, %v274, 0
        %437 = vmatprep.subr.mxu0 0.0
        %438 = vmatpush1.msra.mxu0 %v286
        %439 = vmatprep.subr.mxu0 0.0
        %440 = vmatpush1.msra.mxu0 0.0
        %441 = vmatprep.subr.mxu0 0.0
        %442 = vmatpush1.msra.mxu0 0.0
        %443 = vmatprep.subr.mxu0 0.0
        %444 = vmatpush1.msra.mxu0 0.0
        %445 = vmatprep.subr.mxu0 0.0
        %446 = vmatpush1.msra.mxu0 0.0
        %447 = vmatprep.subr.mxu0 0.0
        %448 = vmatpush1.msra.mxu0 0.0
        %449 = vmatprep.subr.mxu0 0.0
        %450 = vmatpush1.msra.mxu0 0.0
        %451 = vmatprep.subr.mxu0 0.0
        %452 = vmatpush1.msra.mxu0 0.0
        %453 = vmatprep.subr.mxu0 0.0
        %454 = vmatpush1.msra.mxu0 0.0
        %455 = vmatprep.subr.mxu0 0.0
        %456 = vmatpush1.msra.mxu0 0.0
        %457 = vmatprep.subr.mxu0 0.0
        %458 = vmatpush1.msra.mxu0 0.0
        %459 = vmatprep.subr.mxu0 0.0
        %460 = vmatpush1.msra.mxu0 0.0
        %461 = vmatprep.subr.mxu0 0.0
        %462 = vmatpush1.msra.mxu0 0.0
        %463 = vmatprep.subr.mxu0 0.0
        %464 = vmatpush1.msra.mxu0 0.0
        %465 = vmatprep.subr.mxu0 0.0
        %466 = vmatpush1.msra.mxu0 0.0
        %467 = vmatprep.subr.mxu0 0.0
        %468 = vmatpush1.msra.mxu0 0.0
        %469 = vmatprep.subr.mxu0 0.0
        %470 = vmatpush1.msra.mxu0 0.0
        %471 = vmatprep.subr.mxu0 0.0
        %472 = vmatpush1.msra.mxu0 0.0
        %473 = vmatprep.subr.mxu0 0.0
        %474 = vmatpush1.msra.mxu0 0.0
        %475 = vmatprep.subr.mxu0 0.0
        %476 = vmatpush1.msra.mxu0 0.0
        %477 = vmatprep.subr.mxu0 0.0
        %478 = vmatpush1.msra.mxu0 0.0
        %479 = vmatprep.subr.mxu0 0.0
        %480 = vmatpush1.msra.mxu0 0.0
        %481 = vmatprep.subr.mxu0 0.0
        %482 = vmatpush1.msra.mxu0 0.0
        %483 = vmatprep.subr.mxu0 0.0
        %484 = vmatpush1.msra.mxu0 0.0
        %485 = vmatprep.subr.mxu0 0.0
        %486 = vmatpush1.msra.mxu0 0.0
        %487 = vmatprep.subr.mxu0 0.0
        %488 = vmatpush1.msra.mxu0 0.0
        %489 = vmatprep.subr.mxu0 0.0
        %490 = vmatpush1.msra.mxu0 0.0
        %491 = vmatprep.subr.mxu0 0.0
        %492 = vmatpush1.msra.mxu0 0.0
        %493 = vmatprep.subr.mxu0 0.0
        %494 = vmatpush1.msra.mxu0 0.0
        %495 = vmatprep.subr.mxu0 0.0
        %496 = vmatpush1.msra.mxu0 0.0
        %497 = vmatprep.subr.mxu0 0.0
        %498 = vmatpush1.msra.mxu0 0.0
        %499 = vmatprep.subr.mxu0 0.0
        %500 = vmatpush1.msra.mxu0 0.0
        %501 = vmatprep.mubr.f32.mxu0 0.0
        %502 = vmatmul.mubr.f32.gmra.mrb[0].mxu0 %v435
        %v503 = vpop.f32.mrb[0].mxu0
        %v504 = vadd.f32 0.0, %v503
        %v505 = vpop.f32.mrb[0].mxu0
        %506 = vdwg.mxu0
        %v507 = vadd.f32 %v431, %v504
        %509 = vset.pattern.permute.xlu0 0
        %510 = vperm.xlu0 %509, %v275
        %v511 = vpop.permute.xlu0 %510
        %v513 = vadd.f32 %v507, %v511
        %vm514 = vcmp.gt.f32.partialorder %v513, 0.0
        %v515 = vmul.f32 %v513, 0.2
        %v516 = vsel %vm514, %v513, %v515
        %518 = vrot.lane.b32.xlu0 %v516, 1
        %v519 = vpop.permute.xlu0 %518
        %v521 = vsel %vm280, 0.0, %v519
        %522 = vrot.lane.b32.xlu0 %v516, 127
        %v523 = vpop.permute.xlu0 %522
        %v525 = vsel %vm285, %v523, 0.0
        %v526 = vld [vmem:[%s3] sm:$0xff]
        %s527 = scalar_lea.vmem %s3, 8
        %v528 = vld [vmem:[%s527] sm:$0xff]
        %v530 = vsel %vm287, %v528, 0
        %532 = vmatprep.subr.mxu0 0.0
        %533 = vmatpush1.msra.mxu0 %v516
        %534 = vmatprep.subr.mxu0 0.0
        %535 = vmatpush1.msra.mxu0 0.0
        %536 = vmatprep.subr.mxu0 0.0
        %537 = vmatpush1.msra.mxu0 0.0
        %538 = vmatprep.subr.mxu0 0.0
        %539 = vmatpush1.msra.mxu0 0.0
        %540 = vmatprep.subr.mxu0 0.0
        %541 = vmatpush1.msra.mxu0 0.0
        %542 = vmatprep.subr.mxu0 0.0
        %543 = vmatpush1.msra.mxu0 0.0
        %544 = vmatprep.subr.mxu0 0.0
        %545 = vmatpush1.msra.mxu0 0.0
        %546 = vmatprep.subr.mxu0 0.0
        %547 = vmatpush1.msra.mxu0 0.0
        %548 = vmatprep.subr.mxu0 0.0
        %549 = vmatpush1.msra.mxu0 0.0
        %550 = vmatprep.subr.mxu0 0.0
        %551 = vmatpush1.msra.mxu0 0.0
        %552 = vmatprep.subr.mxu0 0.0
        %553 = vmatpush1.msra.mxu0 0.0
        %554 = vmatprep.subr.mxu0 0.0
        %555 = vmatpush1.msra.mxu0 0.0
        %556 = vmatprep.subr.mxu0 0.0
        %557 = vmatpush1.msra.mxu0 0.0
        %558 = vmatprep.subr.mxu0 0.0
        %559 = vmatpush1.msra.mxu0 0.0
        %560 = vmatprep.subr.mxu0 0.0
        %561 = vmatpush1.msra.mxu0 0.0
        %562 = vmatprep.subr.mxu0 0.0
        %563 = vmatpush1.msra.mxu0 0.0
        %564 = vmatprep.subr.mxu0 0.0
        %565 = vmatpush1.msra.mxu0 0.0
        %566 = vmatprep.subr.mxu0 0.0
        %567 = vmatpush1.msra.mxu0 0.0
        %568 = vmatprep.subr.mxu0 0.0
        %569 = vmatpush1.msra.mxu0 0.0
        %570 = vmatprep.subr.mxu0 0.0
        %571 = vmatpush1.msra.mxu0 0.0
        %572 = vmatprep.subr.mxu0 0.0
        %573 = vmatpush1.msra.mxu0 0.0
        %574 = vmatprep.subr.mxu0 0.0
        %575 = vmatpush1.msra.mxu0 0.0
        %576 = vmatprep.subr.mxu0 0.0
        %577 = vmatpush1.msra.mxu0 0.0
        %578 = vmatprep.subr.mxu0 0.0
        %579 = vmatpush1.msra.mxu0 0.0
        %580 = vmatprep.subr.mxu0 0.0
        %581 = vmatpush1.msra.mxu0 0.0
        %582 = vmatprep.subr.mxu0 0.0
        %583 = vmatpush1.msra.mxu0 0.0
        %584 = vmatprep.subr.mxu0 0.0
        %585 = vmatpush1.msra.mxu0 0.0
        %586 = vmatprep.subr.mxu0 0.0
        %587 = vmatpush1.msra.mxu0 0.0
        %588 = vmatprep.subr.mxu0 0.0
        %589 = vmatpush1.msra.mxu0 0.0
        %590 = vmatprep.subr.mxu0 0.0
        %591 = vmatpush1.msra.mxu0 0.0
        %592 = vmatprep.subr.mxu0 0.0
        %593 = vmatpush1.msra.mxu0 0.0
        %594 = vmatprep.subr.mxu0 0.0
        %595 = vmatpush1.msra.mxu0 0.0
        %596 = vmatprep.mubr.f32.mxu0 0.0
        %597 = vmatmul.mubr.f32.gmra.mrb[0].mxu0 %v530
        %v598 = vpop.f32.mrb[0].mxu0
        %v599 = vadd.f32 0.0, %v598
        %v600 = vpop.f32.mrb[0].mxu0
        %601 = vdwg.mxu0
        %v603 = vsel %vm287, %v526, 0
        %605 = vmatprep.subr.mxu0 0.0
        %606 = vmatpush1.msra.mxu0 %v521
        %607 = vmatprep.subr.mxu0 0.0
        %608 = vmatpush1.msra.mxu0 0.0
        %609 = vmatprep.subr.mxu0 0.0
        %610 = vmatpush1.msra.mxu0 0.0
        %611 = vmatprep.subr.mxu0 0.0
        %612 = vmatpush1.msra.mxu0 0.0
        %613 = vmatprep.subr.mxu0 0.0
        %614 = vmatpush1.msra.mxu0 0.0
        %615 = vmatprep.subr.mxu0 0.0
        %616 = vmatpush1.msra.mxu0 0.0
        %617 = vmatprep.subr.mxu0 0.0
        %618 = vmatpush1.msra.mxu0 0.0
        %619 = vmatprep.subr.mxu0 0.0
        %620 = vmatpush1.msra.mxu0 0.0
        %621 = vmatprep.subr.mxu0 0.0
        %622 = vmatpush1.msra.mxu0 0.0
        %623 = vmatprep.subr.mxu0 0.0
        %624 = vmatpush1.msra.mxu0 0.0
        %625 = vmatprep.subr.mxu0 0.0
        %626 = vmatpush1.msra.mxu0 0.0
        %627 = vmatprep.subr.mxu0 0.0
        %628 = vmatpush1.msra.mxu0 0.0
        %629 = vmatprep.subr.mxu0 0.0
        %630 = vmatpush1.msra.mxu0 0.0
        %631 = vmatprep.subr.mxu0 0.0
        %632 = vmatpush1.msra.mxu0 0.0
        %633 = vmatprep.subr.mxu0 0.0
        %634 = vmatpush1.msra.mxu0 0.0
        %635 = vmatprep.subr.mxu0 0.0
        %636 = vmatpush1.msra.mxu0 0.0
        %637 = vmatprep.subr.mxu0 0.0
        %638 = vmatpush1.msra.mxu0 0.0
        %639 = vmatprep.subr.mxu0 0.0
        %640 = vmatpush1.msra.mxu0 0.0
        %641 = vmatprep.subr.mxu0 0.0
        %642 = vmatpush1.msra.mxu0 0.0
        %643 = vmatprep.subr.mxu0 0.0
        %644 = vmatpush1.msra.mxu0 0.0
        %645 = vmatprep.subr.mxu0 0.0
        %646 = vmatpush1.msra.mxu0 0.0
        %647 = vmatprep.subr.mxu0 0.0
        %648 = vmatpush1.msra.mxu0 0.0
        %649 = vmatprep.subr.mxu0 0.0
        %650 = vmatpush1.msra.mxu0 0.0
        %651 = vmatprep.subr.mxu0 0.0
        %652 = vmatpush1.msra.mxu0 0.0
        %653 = vmatprep.subr.mxu0 0.0
        %654 = vmatpush1.msra.mxu0 0.0
        %655 = vmatprep.subr.mxu0 0.0
        %656 = vmatpush1.msra.mxu0 0.0
        %657 = vmatprep.subr.mxu0 0.0
        %658 = vmatpush1.msra.mxu0 0.0
        %659 = vmatprep.subr.mxu0 0.0
        %660 = vmatpush1.msra.mxu0 0.0
        %661 = vmatprep.subr.mxu0 0.0
        %662 = vmatpush1.msra.mxu0 0.0
        %663 = vmatprep.subr.mxu0 0.0
        %664 = vmatpush1.msra.mxu0 0.0
        %665 = vmatprep.subr.mxu0 0.0
        %666 = vmatpush1.msra.mxu0 0.0
        %667 = vmatprep.subr.mxu0 0.0
        %668 = vmatpush1.msra.mxu0 0.0
        %669 = vmatprep.mubr.f32.mxu0 0.0
        %670 = vmatmul.mubr.f32.gmra.mrb[0].mxu0 %v603
        %v671 = vpop.f32.mrb[0].mxu0
        %v672 = vadd.f32 %v599, %v671
        %v673 = vpop.f32.mrb[0].mxu0
        %674 = vdwg.mxu0
        %s675 = scalar_lea.vmem %s3, 16
        %v676 = vld [vmem:[%s675] sm:$0xff]
        %v678 = vsel %vm287, %v676, 0
        %680 = vmatprep.subr.mxu0 0.0
        %681 = vmatpush1.msra.mxu0 %v525
        %682 = vmatprep.subr.mxu0 0.0
        %683 = vmatpush1.msra.mxu0 0.0
        %684 = vmatprep.subr.mxu0 0.0
        %685 = vmatpush1.msra.mxu0 0.0
        %686 = vmatprep.subr.mxu0 0.0
        %687 = vmatpush1.msra.mxu0 0.0
        %688 = vmatprep.subr.mxu0 0.0
        %689 = vmatpush1.msra.mxu0 0.0
        %690 = vmatprep.subr.mxu0 0.0
        %691 = vmatpush1.msra.mxu0 0.0
        %692 = vmatprep.subr.mxu0 0.0
        %693 = vmatpush1.msra.mxu0 0.0
        %694 = vmatprep.subr.mxu0 0.0
        %695 = vmatpush1.msra.mxu0 0.0
        %696 = vmatprep.subr.mxu0 0.0
        %697 = vmatpush1.msra.mxu0 0.0
        %698 = vmatprep.subr.mxu0 0.0
        %699 = vmatpush1.msra.mxu0 0.0
        %700 = vmatprep.subr.mxu0 0.0
        %701 = vmatpush1.msra.mxu0 0.0
        %702 = vmatprep.subr.mxu0 0.0
        %703 = vmatpush1.msra.mxu0 0.0
        %704 = vmatprep.subr.mxu0 0.0
        %705 = vmatpush1.msra.mxu0 0.0
        %706 = vmatprep.subr.mxu0 0.0
        %707 = vmatpush1.msra.mxu0 0.0
        %708 = vmatprep.subr.mxu0 0.0
        %709 = vmatpush1.msra.mxu0 0.0
        %710 = vmatprep.subr.mxu0 0.0
        %711 = vmatpush1.msra.mxu0 0.0
        %712 = vmatprep.subr.mxu0 0.0
        %713 = vmatpush1.msra.mxu0 0.0
        %714 = vmatprep.subr.mxu0 0.0
        %715 = vmatpush1.msra.mxu0 0.0
        %716 = vmatprep.subr.mxu0 0.0
        %717 = vmatpush1.msra.mxu0 0.0
        %718 = vmatprep.subr.mxu0 0.0
        %719 = vmatpush1.msra.mxu0 0.0
        %720 = vmatprep.subr.mxu0 0.0
        %721 = vmatpush1.msra.mxu0 0.0
        %722 = vmatprep.subr.mxu0 0.0
        %723 = vmatpush1.msra.mxu0 0.0
        %724 = vmatprep.subr.mxu0 0.0
        %725 = vmatpush1.msra.mxu0 0.0
        %726 = vmatprep.subr.mxu0 0.0
        %727 = vmatpush1.msra.mxu0 0.0
        %728 = vmatprep.subr.mxu0 0.0
        %729 = vmatpush1.msra.mxu0 0.0
        %730 = vmatprep.subr.mxu0 0.0
        %731 = vmatpush1.msra.mxu0 0.0
        %732 = vmatprep.subr.mxu0 0.0
        %733 = vmatpush1.msra.mxu0 0.0
        %734 = vmatprep.subr.mxu0 0.0
        %735 = vmatpush1.msra.mxu0 0.0
        %736 = vmatprep.subr.mxu0 0.0
        %737 = vmatpush1.msra.mxu0 0.0
        %738 = vmatprep.subr.mxu0 0.0
        %739 = vmatpush1.msra.mxu0 0.0
        %740 = vmatprep.subr.mxu0 0.0
        %741 = vmatpush1.msra.mxu0 0.0
        %742 = vmatprep.subr.mxu0 0.0
        %743 = vmatpush1.msra.mxu0 0.0
        %744 = vmatprep.mubr.f32.mxu0 0.0
        %745 = vmatmul.mubr.f32.gmra.mrb[0].mxu0 %v678
        %v746 = vpop.f32.mrb[0].mxu0
        %v747 = vadd.f32 0.0, %v746
        %v748 = vpop.f32.mrb[0].mxu0
        %749 = vdwg.mxu0
        %v750 = vadd.f32 %v672, %v747
        %v751 = vld [vmem:[%s4] sm:$0xff]
        %753 = vset.pattern.permute.xlu0 0
        %754 = vperm.xlu0 %753, %v751
        %v755 = vpop.permute.xlu0 %754
        %v757 = vadd.f32 %v750, %v755
        %v758 = vadd.f32 %v757, %v269
        %vm759 = vcmask 130048
        %760 = vst.msk [vmem:[%s268] sm:$0xff] %vm759, %v758
        %s761 = sand.u32 %s155, 1
        %s762 = scalar_lea.sflag [#allocation4], %s761
        %s763 = sand.u32 %s155, 1
        %s764 = smul.addr %s763, 8
        %s765 = scalar_lea.vmem [#allocation7], %s764
        // Predicated region
        $region49: #{tpu_custom_call.1} parent=39 // pred_check
          %p766 = pneg %p165
        $region50: #{tpu_custom_call.1} parent=39 // pred_check_branch
          %768 = sbr.rel (%p766) target = $region52
        $region51: #{tpu_custom_call.1} parent=39 // pred_region
          %s770 = ssub.s32 128, 128
          %771 = vsyncadd %s762, %s770
          %s772 = sadd.s32 %s28, %s27
          %s773 = smul.addr %s772, 128
          %s774 = scalar_lea.hbm %s5, %s773
          %s776 = sshll.u32 %s765, 4
          %s777 = int_to_ptr.vmem [resolvable:$true] %s776
          %779 = dma.vmem_to_hbm [thread:$0]  %s777, 128, %s774, %s762
        $region52: #{tpu_custom_call.1} parent=39 // pred_fallthru
          _
      $region40: #{tpu_custom_call.1} parent=5 // pred_fallthru
        _
      %p780 = scmp.le.s32.totalorder 2, %s18
      // Predicated region
      $region53: #{tpu_custom_call.1} parent=5 // pred_check
        %p781 = pneg %p780
      $region54: #{tpu_custom_call.1} parent=5 // pred_check_branch
        %783 = sbr.rel (%p781) target = $region56
      $region55: #{tpu_custom_call.1} parent=5 // pred_region
        %s784 = ssub.s32 %s18, 2
        // Predicated region
        $region57: #{tpu_custom_call.1} parent=55 // pred_check
          %p785 = pneg %p171
        $region58: #{tpu_custom_call.1} parent=55 // pred_check_branch
          %787 = sbr.rel (%p785) target = $region60
        $region59: #{tpu_custom_call.1} parent=55 // pred_region
          %s788 = sand.u32 %s156, 1
          %s789 = scalar_lea.sflag [#allocation4], %s788
          %s790 = sand.u32 %s156, 1
          %s791 = smul.addr %s790, 8
          %s792 = scalar_lea.vmem [#allocation7], %s791
          %793 = dma.done %s789, 128
        $region60: #{tpu_custom_call.1} parent=55 // pred_fallthru
          _
      $region56: #{tpu_custom_call.1} parent=5 // pred_fallthru
        _
    $region6: #{tpu_custom_call.1} parent=1 // loop_footer
      %s22 = sadd.s32 1, %s18
    $region7: #{tpu_custom_call.1} parent=1 // loop_footer_branch
      %17 = sbr.rel target = $region3
    $region8: #{tpu_custom_call.1} parent=1 // loop_exit
      _
    %794 = vsyncpa [#allocation3], 1
    %s795 = scalar_lea.sflag [#allocation3], 1
    %796 = vsyncpa %s795, 1
    %797 = vsyncpa [#allocation6], 1
    %798 = vsyncpa [#allocation4], 1
    %s799 = scalar_lea.sflag [#allocation4], 1
    %800 = vsyncpa %s799, 1

</llo_original>
